<compile_context>
chip_gen: v7x
topology: tpu7x:2x2x1
jax: 0.10.0
libtpu: 0.0.40
codegen_flags: <defaults>
</compile_context>

<pallas_src>
import jax
import jax.numpy as jnp
from jax.experimental import pallas as pl
from jax.experimental.pallas import tpu as pltpu

BN_EPS = 1e-5
LANE = 128


def _round_up(x, m):
    return ((x + m - 1) // m) * m


def _mlp2_kernel(x_ref, w1_ref, b1_ref, w2_ref, b2_ref, o_ref):
    # Linear1 with BN pre-folded: (TILE_B, F)bf16 @ (F, H)bf16 -> f32 accumulate.
    h = jnp.dot(x_ref[...], w1_ref[...], preferred_element_type=jnp.float32)
    h = h + b1_ref[...]
    # ReLU
    h = jnp.maximum(h, 0.0)
    # Linear2: feed MXU in bf16, accumulate f32. Output columns are lane-padded to 128.
    out = jnp.dot(h.astype(w2_ref.dtype), w2_ref[...],
                  preferred_element_type=jnp.float32)
    o_ref[...] = out + b2_ref[...]


def prepare_params(params):
    """One-time prep: fold eval-mode BN into Linear1, cast weights to bf16,
    lane-pad the output projection to a multiple of 128 columns."""
    inv_std = jax.lax.rsqrt(params["running_var"].astype(jnp.float32) + BN_EPS)
    scale = params["gamma"] * inv_std                                   # (H,)
    w1f = (params["w1"] * scale[None, :]).astype(jnp.bfloat16)          # (F, H)
    b1f = ((params["b1"] - params["running_mean"]) * scale
           + params["beta"]).astype(jnp.float32).reshape(1, -1)         # (1, H)

    H, C = params["w2"].shape
    c_pad = _round_up(max(C, LANE), LANE)
    w2p = jnp.zeros((H, c_pad), jnp.bfloat16).at[:, :C].set(
        params["w2"].astype(jnp.bfloat16))
    b2p = jnp.zeros((1, c_pad), jnp.float32).at[:, :C].set(params["b2"])
    return dict(w1=w1f, b1=b1f, w2=w2p, b2=b2p, num_classes=C)


def mlp2_forward(x, prepped, tile_b=512):
    """x: (B, C, H, W) or (B, F). prepped: output of prepare_params."""
    B = x.shape[0]
    x2d = x.reshape(B, -1).astype(jnp.bfloat16)          # nn.Flatten (+ bf16 feed)
    F = x2d.shape[1]
    H = prepped["w1"].shape[1]
    c_pad = prepped["w2"].shape[1]
    C = prepped["num_classes"]

    # Batch tile: multiple of 8 sublanes, capped at tile_b; pad B up to a full tile.
    tile = min(tile_b, _round_up(B, 8))
    b_pad = _round_up(B, tile)
    if b_pad != B:
        x2d = jnp.pad(x2d, ((0, b_pad - B), (0, 0)))
    grid = (b_pad // tile,)

    out = pl.pallas_call(
        _mlp2_kernel,
        out_shape=jax.ShapeDtypeStruct((b_pad, c_pad), jnp.float32),
        grid_spec=pltpu.PrefetchScalarGridSpec(
            num_scalar_prefetch=0,
            grid=grid,
            in_specs=[
                pl.BlockSpec((tile, F), lambda i: (i, 0)),      # x tile: pipelined
                pl.BlockSpec((F, H), lambda i: (0, 0)),         # weights: VMEM-resident
                pl.BlockSpec((1, H), lambda i: (0, 0)),
                pl.BlockSpec((H, c_pad), lambda i: (0, 0)),
                pl.BlockSpec((1, c_pad), lambda i: (0, 0)),
            ],
            out_specs=pl.BlockSpec((tile, c_pad), lambda i: (i, 0)),
        ),
        compiler_params=pltpu.CompilerParams(
            dimension_semantics=("parallel",)),
    )(x2d, prepped["w1"], prepped["b1"], prepped["w2"], prepped["b2"])
    return out[:B, :C]


def init_params(key, num_features=784, hidden_units=196, num_classes=10):
    """Mirror PyTorch defaults (uniform +-1/sqrt(fan_in) for Linear; BN gamma=1,
    beta=0, running_mean=0, running_var=1)."""
    k1, k2, k3, k4 = jax.random.split(key, 4)
    bound1 = 1.0 / (num_features ** 0.5)
    bound2 = 1.0 / (hidden_units ** 0.5)
    return dict(
        # stored as (in_features, out_features), i.e. transpose of torch's weight
        w1=jax.random.uniform(k1, (num_features, hidden_units), jnp.float32, -bound1, bound1),
        b1=jax.random.uniform(k2, (hidden_units,), jnp.float32, -bound1, bound1),
        gamma=jnp.ones((hidden_units,), jnp.float32),
        beta=jnp.zeros((hidden_units,), jnp.float32),
        running_mean=jnp.zeros((hidden_units,), jnp.float32),
        running_var=jnp.ones((hidden_units,), jnp.float32),
        w2=jax.random.uniform(k3, (hidden_units, num_classes), jnp.float32, -bound2, bound2),
        b2=jax.random.uniform(k4, (num_classes,), jnp.float32, -bound2, bound2),
    )


def mlp2_reference_f32(x, params):
    """Pure-f32 reference with explicit eval-mode BatchNorm (module semantics)."""
    B = x.shape[0]
    h = x.reshape(B, -1).astype(jnp.float32) @ params["w1"] + params["b1"]
    h = (h - params["running_mean"]) * jax.lax.rsqrt(params["running_var"] + BN_EPS)
    h = h * params["gamma"] + params["beta"]
    h = jnp.maximum(h, 0.0)
    return h @ params["w2"] + params["b2"]


def mlp2_reference_bf16(x, prepped):
    """Reference mirroring the kernel arithmetic (bf16 operands, f32 accumulate)."""
    B = x.shape[0]
    x2d = x.reshape(B, -1).astype(jnp.bfloat16)
    h = jnp.dot(x2d, prepped["w1"], preferred_element_type=jnp.float32) + prepped["b1"]
    h = jnp.maximum(h, 0.0)
    out = jnp.dot(h.astype(jnp.bfloat16), prepped["w2"],
                  preferred_element_type=jnp.float32) + prepped["b2"]
    return out[:, :prepped["num_classes"]]


if __name__ == "__main__":
    key = jax.random.PRNGKey(0)
    kx, kp = jax.random.split(key)

    # Small MNIST-like batch: (B=8, C=1, H=28, W=28) -> 784 features (module default).
    B = 8
    x = jax.random.normal(kx, (B, 1, 28, 28), jnp.float32)
    params = init_params(kp, num_features=784, hidden_units=196, num_classes=10)

    # Non-trivial BN stats / affine so the BN fold is actually exercised.
    km, kv, kg, kb = jax.random.split(kp, 4)
    params["running_mean"] = 0.1 * jax.random.normal(km, (196,), jnp.float32)
    params["running_var"] = 1.0 + 0.2 * jax.random.uniform(kv, (196,), jnp.float32)
    params["gamma"] = 1.0 + 0.1 * jax.random.normal(kg, (196,), jnp.float32)
    params["beta"] = 0.1 * jax.random.normal(kb, (196,), jnp.float32)

    prepped = prepare_params(params)
    out = jax.block_until_ready(mlp2_forward(x, prepped))

    assert out.shape == (B, 10), out.shape
    assert out.dtype == jnp.float32, out.dtype

    ref_exact = mlp2_reference_bf16(x, prepped)
    ref_f32 = mlp2_reference_f32(x, params)
    err_exact = float(jnp.max(jnp.abs(out - ref_exact)))
    err_f32 = float(jnp.max(jnp.abs(out - ref_f32)))
    assert jnp.allclose(out, ref_exact, atol=2e-3, rtol=2e-3), err_exact
    assert jnp.allclose(out, ref_f32, atol=5e-2, rtol=5e-2), err_f32

    print("KERNEL_OK")
</pallas_src>

<mosaic_0001>
module attributes {stable_mosaic.version = 11 : i64} {
  func.func @_mlp2_kernel(%arg0: i32, %arg1: memref<8x784xbf16, #tpu.memory_space<vmem>>, %arg2: memref<784x196xbf16, #tpu.memory_space<vmem>>, %arg3: memref<1x196xf32, #tpu.memory_space<vmem>>, %arg4: memref<196x128xbf16, #tpu.memory_space<vmem>>, %arg5: memref<1x128xf32, #tpu.memory_space<vmem>>, %arg6: memref<8x128xf32, #tpu.memory_space<vmem>>) attributes {dimension_semantics = [#tpu.dimension_semantics<parallel>], iteration_bounds = array<i64: 1>, scalar_prefetch = 0 : i64, scratch_operands = 0 : i64, tpu.core_type = #tpu.core_type<tc>, window_params = [{transform_indices = @transform_0, window_bounds = array<i64: 8, 784>}, {pipeline_mode = #tpu.pipeline_mode<synchronous>, transform_indices = @transform_1, window_bounds = array<i64: 784, 196>}, {pipeline_mode = #tpu.pipeline_mode<synchronous>, transform_indices = @transform_2, window_bounds = array<i64: 1, 196>}, {pipeline_mode = #tpu.pipeline_mode<synchronous>, transform_indices = @transform_3, window_bounds = array<i64: 196, 128>}, {pipeline_mode = #tpu.pipeline_mode<synchronous>, transform_indices = @transform_4, window_bounds = array<i64: 1, 128>}, {transform_indices = @transform_5, window_bounds = array<i64: 8, 128>}]} {
    %c0 = arith.constant 0 : index
    %c0_0 = arith.constant 0 : index
    %0 = vector.load %arg1[%c0, %c0_0] : memref<8x784xbf16, #tpu.memory_space<vmem>>, vector<8x784xbf16>
    %c0_1 = arith.constant 0 : index
    %c0_2 = arith.constant 0 : index
    %1 = vector.load %arg2[%c0_1, %c0_2] : memref<784x196xbf16, #tpu.memory_space<vmem>>, vector<784x196xbf16>
    %cst = arith.constant dense<0.000000e+00> : vector<8x196xf32>
    %2 = tpu.matmul %0, %1, %cst {dimension_numbers = #tpu.dot_dimension_numbers<[1], [0], [0], [1], [0, 0, 1, 1], [], []>} : vector<8x784xbf16>, vector<784x196xbf16>, vector<8x196xf32> -> vector<8x196xf32>
    %c0_3 = arith.constant 0 : index
    %c0_4 = arith.constant 0 : index
    %3 = vector.load %arg3[%c0_3, %c0_4] : memref<1x196xf32, #tpu.memory_space<vmem>>, vector<1x196xf32>
    %4 = vector.broadcast %3 : vector<1x196xf32> to vector<8x196xf32>
    %5 = arith.addf %2, %4 : vector<8x196xf32>
    %cst_5 = arith.constant 0.000000e+00 : f32
    %6 = vector.broadcast %cst_5 : f32 to vector<8x196xf32>
    %7 = arith.maximumf %5, %6 : vector<8x196xf32>
    %8 = arith.truncf %7 : vector<8x196xf32> to vector<8x196xbf16>
    %c0_6 = arith.constant 0 : index
    %c0_7 = arith.constant 0 : index
    %9 = vector.load %arg4[%c0_6, %c0_7] : memref<196x128xbf16, #tpu.memory_space<vmem>>, vector<196x128xbf16>
    %cst_8 = arith.constant dense<0.000000e+00> : vector<8x128xf32>
    %10 = tpu.matmul %8, %9, %cst_8 {dimension_numbers = #tpu.dot_dimension_numbers<[1], [0], [0], [1], [0, 0, 1, 1], [], []>} : vector<8x196xbf16>, vector<196x128xbf16>, vector<8x128xf32> -> vector<8x128xf32>
    %c0_9 = arith.constant 0 : index
    %c0_10 = arith.constant 0 : index
    %11 = vector.load %arg5[%c0_9, %c0_10] : memref<1x128xf32, #tpu.memory_space<vmem>>, vector<1x128xf32>
    %12 = vector.broadcast %11 : vector<1x128xf32> to vector<8x128xf32>
    %13 = arith.addf %10, %12 : vector<8x128xf32>
    %c0_11 = arith.constant 0 : index
    %c0_12 = arith.constant 0 : index
    %14 = vector.load %arg6[%c0_11, %c0_12] : memref<8x128xf32, #tpu.memory_space<vmem>>, vector<8x128xf32>
    tpu.vector_store %arg6[%c0_11, %c0_12], %13 {strides = array<i32>} : memref<8x128xf32, #tpu.memory_space<vmem>>, vector<8x128xf32>,
    return
  }
  func.func @transform_0(%arg0: i32) -> (i32, i32) {
    %c0_i32 = arith.constant 0 : i32
    %c0_i32_0 = arith.constant 0 : i32
    return %arg0, %c0_i32 : i32, i32
  }
  func.func @transform_1(%arg0: i32) -> (i32, i32) {
    %c0_i32 = arith.constant 0 : i32
    %c0_i32_0 = arith.constant 0 : i32
    %c0_i32_1 = arith.constant 0 : i32
    return %c0_i32, %c0_i32_0 : i32, i32
  }
  func.func @transform_2(%arg0: i32) -> (i32, i32) {
    %c0_i32 = arith.constant 0 : i32
    %c0_i32_0 = arith.constant 0 : i32
    %c0_i32_1 = arith.constant 0 : i32
    return %c0_i32, %c0_i32_0 : i32, i32
  }
  func.func @transform_3(%arg0: i32) -> (i32, i32) {
    %c0_i32 = arith.constant 0 : i32
    %c0_i32_0 = arith.constant 0 : i32
    %c0_i32_1 = arith.constant 0 : i32
    return %c0_i32, %c0_i32_0 : i32, i32
  }
  func.func @transform_4(%arg0: i32) -> (i32, i32) {
    %c0_i32 = arith.constant 0 : i32
    %c0_i32_0 = arith.constant 0 : i32
    %c0_i32_1 = arith.constant 0 : i32
    return %c0_i32, %c0_i32_0 : i32, i32
  }
  func.func @transform_5(%arg0: i32) -> (i32, i32) {
    %c0_i32 = arith.constant 0 : i32
    %c0_i32_0 = arith.constant 0 : i32
    return %arg0, %c0_i32 : i32, i32
  }
}

</mosaic_0001>

<llo_original>
// kernel: tpu_custom_call.1
$region0: #{tpu_custom_call.1}
  #allocation0 [shape = 'u32[]', space=smem, size = 0x4, offset = 0x4, fixed_abs, tag = 'smem constant byte address 0x4 - core index']
  #allocation1 [shape = 'u32[144,128]{1,0:T(1,128)}', space=vmem, size = 0x12000, scoped, tag = 'internal scratch']
  %s0 = inlined_call_operand.vmem [shape: bf16[8,784], index: 0, kind: input, shape index: {}]
  %s1 = inlined_call_operand.vmem [shape: bf16[784,196], index: 1, kind: input, shape index: {}]
  %s2 = inlined_call_operand.vmem [shape: f32[1,196], index: 2, kind: input, shape index: {}]
  %s3 = inlined_call_operand.vmem [shape: bf16[196,128], index: 3, kind: input, shape index: {}]
  %s4 = inlined_call_operand.vmem [shape: f32[1,128], index: 4, kind: input, shape index: {}]
  %s5 = inlined_call_operand.hbm [shape: f32[8,128], index: 5, kind: output, shape index: {}]
  %s6 = sld [smem:[#allocation0]]
  $region30: #{tpu_custom_call.1} parent=0
    _
  %s8 = ssub.s32 1, %s6
  %s9 = scalar_select 0, %s8, %s6
  $region1: #{tpu_custom_call.1} parent=0
    #allocation2 [shape = 'u8[4096]{0}', space=vmem, size = 0x1000, scoped, tag = 'output window, operand 0, single buffered']
    #allocation3 [shape = 's32[1]{0}', space=sflag, size = 0x4, scoped, tag = 'scoped memory for tpu_custom_call.1']
    %10 = vsyncpa [#allocation3], 0
    // Predicated region
    $region2: #{tpu_custom_call.1} parent=1 // pred_check
      _
    $region3: #{tpu_custom_call.1} parent=1 // pred_check_branch
      %12 = sbr.rel (0) target = $region5
    $region4: #{tpu_custom_call.1} parent=1 // pred_region
      _
    $region5: #{tpu_custom_call.1} parent=1 // pred_fallthru
      _
    // Predicated region
    $region6: #{tpu_custom_call.1} parent=1 // pred_check
      _
    $region7: #{tpu_custom_call.1} parent=1 // pred_check_branch
      %14 = sbr.rel (0) target = $region9
    $region8: #{tpu_custom_call.1} parent=1 // pred_region
      _
    $region9: #{tpu_custom_call.1} parent=1 // pred_fallthru
      _
    // Predicated region
    $region10: #{tpu_custom_call.1} parent=1 // pred_check
      _
    $region11: #{tpu_custom_call.1} parent=1 // pred_check_branch
      %16 = sbr.rel (0) target = $region13
    $region12: #{tpu_custom_call.1} parent=1 // pred_region
      _
    $region13: #{tpu_custom_call.1} parent=1 // pred_fallthru
      _
    // Predicated region
    $region14: #{tpu_custom_call.1} parent=1 // pred_check
      _
    $region15: #{tpu_custom_call.1} parent=1 // pred_check_branch
      %18 = sbr.rel (0) target = $region17
    $region16: #{tpu_custom_call.1} parent=1 // pred_region
      _
    $region17: #{tpu_custom_call.1} parent=1 // pred_fallthru
      _
    // Predicated region
    $region18: #{tpu_custom_call.1} parent=1 // pred_check
      _
    $region19: #{tpu_custom_call.1} parent=1 // pred_check_branch
      %20 = sbr.rel (0) target = $region21
    $region20: #{tpu_custom_call.1} parent=1 // pred_region
      _
    $region21: #{tpu_custom_call.1} parent=1 // pred_fallthru
      _
    %v22 = vld [vmem:[%s0] sm:$0xff]
    %v23 = vld [vmem:[%s0 + $0x8] sm:$0xff]
    %v24 = vld [vmem:[%s0 + $0x10] sm:$0xff]
    %v25 = vld [vmem:[%s0 + $0x18] sm:$0xf]
    %v26 = vld [vmem:[%s1] sm:$0xff]
    %v27 = vld [vmem:[%s1 + $0x8] sm:$0xff]
    %v28 = vld [vmem:[%s1 + $0x10] sm:$0xff]
    %v29 = vld [vmem:[%s1 + $0x18] sm:$0xff]
    %v30 = vld [vmem:[%s1 + $0x20] sm:$0xff]
    %v31 = vld [vmem:[%s1 + $0x28] sm:$0xff]
    %v32 = vld [vmem:[%s1 + $0x30] sm:$0xff]
    %v33 = vld [vmem:[%s1 + $0x38] sm:$0xff]
    %v34 = vld [vmem:[%s1 + $0x40] sm:$0xff]
    %v35 = vld [vmem:[%s1 + $0x48] sm:$0xff]
    %v36 = vld [vmem:[%s1 + $0x50] sm:$0xff]
    %v37 = vld [vmem:[%s1 + $0x58] sm:$0xff]
    %v38 = vld [vmem:[%s1 + $0x60] sm:$0xff]
    %v39 = vld [vmem:[%s1 + $0x68] sm:$0xff]
    %v40 = vld [vmem:[%s1 + $0x70] sm:$0xff]
    %v41 = vld [vmem:[%s1 + $0x78] sm:$0xff]
    %v42 = vld [vmem:[%s1 + $0x80] sm:$0xff]
    %v43 = vld [vmem:[%s1 + $0x88] sm:$0xff]
    %v44 = vld [vmem:[%s1 + $0x90] sm:$0xff]
    %v45 = vld [vmem:[%s1 + $0x98] sm:$0xff]
    %v46 = vld [vmem:[%s1 + $0xa0] sm:$0xff]
    %v47 = vld [vmem:[%s1 + $0xa8] sm:$0xff]
    %v48 = vld [vmem:[%s1 + $0xb0] sm:$0xff]
    %v49 = vld [vmem:[%s1 + $0xb8] sm:$0xff]
    %v50 = vld [vmem:[%s1 + $0xc0] sm:$0xff]
    %v51 = vld [vmem:[%s1 + $0xc8] sm:$0xff]
    %v52 = vld [vmem:[%s1 + $0xd0] sm:$0xff]
    %v53 = vld [vmem:[%s1 + $0xd8] sm:$0xff]
    %v54 = vld [vmem:[%s1 + $0xe0] sm:$0xff]
    %v55 = vld [vmem:[%s1 + $0xe8] sm:$0xff]
    %v56 = vld [vmem:[%s1 + $0xf0] sm:$0xff]
    %v57 = vld [vmem:[%s1 + $0xf8] sm:$0xff]
    %v58 = vld [vmem:[%s1 + $0x100] sm:$0xff]
    %v59 = vld [vmem:[%s1 + $0x108] sm:$0xff]
    %v60 = vld [vmem:[%s1 + $0x110] sm:$0xff]
    %v61 = vld [vmem:[%s1 + $0x118] sm:$0xff]
    %v62 = vld [vmem:[%s1 + $0x120] sm:$0xff]
    %v63 = vld [vmem:[%s1 + $0x128] sm:$0xff]
    %v64 = vld [vmem:[%s1 + $0x130] sm:$0xff]
    %v65 = vld [vmem:[%s1 + $0x138] sm:$0xff]
    %v66 = vld [vmem:[%s1 + $0x140] sm:$0xff]
    %v67 = vld [vmem:[%s1 + $0x148] sm:$0xff]
    %v68 = vld [vmem:[%s1 + $0x150] sm:$0xff]
    %v69 = vld [vmem:[%s1 + $0x158] sm:$0xff]
    %v70 = vld [vmem:[%s1 + $0x160] sm:$0xff]
    %v71 = vld [vmem:[%s1 + $0x168] sm:$0xff]
    %v72 = vld [vmem:[%s1 + $0x170] sm:$0xff]
    %v73 = vld [vmem:[%s1 + $0x178] sm:$0xff]
    %v74 = vld [vmem:[%s1 + $0x180] sm:$0xff]
    %v75 = vld [vmem:[%s1 + $0x188] sm:$0xff]
    %v76 = vld [vmem:[%s1 + $0x190] sm:$0xff]
    %v77 = vld [vmem:[%s1 + $0x198] sm:$0xff]
    %v78 = vld [vmem:[%s1 + $0x1a0] sm:$0xff]
    %v79 = vld [vmem:[%s1 + $0x1a8] sm:$0xff]
    %v80 = vld [vmem:[%s1 + $0x1b0] sm:$0xff]
    %v81 = vld [vmem:[%s1 + $0x1b8] sm:$0xff]
    %v82 = vld [vmem:[%s1 + $0x1c0] sm:$0xff]
    %v83 = vld [vmem:[%s1 + $0x1c8] sm:$0xff]
    %v84 = vld [vmem:[%s1 + $0x1d0] sm:$0xff]
    %v85 = vld [vmem:[%s1 + $0x1d8] sm:$0xff]
    %v86 = vld [vmem:[%s1 + $0x1e0] sm:$0xff]
    %v87 = vld [vmem:[%s1 + $0x1e8] sm:$0xff]
    %v88 = vld [vmem:[%s1 + $0x1f0] sm:$0xff]
    %v89 = vld [vmem:[%s1 + $0x1f8] sm:$0xff]
    %v90 = vld [vmem:[%s1 + $0x200] sm:$0xff]
    %v91 = vld [vmem:[%s1 + $0x208] sm:$0xff]
    %v92 = vld [vmem:[%s1 + $0x210] sm:$0xff]
    %v93 = vld [vmem:[%s1 + $0x218] sm:$0xff]
    %v94 = vld [vmem:[%s1 + $0x220] sm:$0xff]
    %v95 = vld [vmem:[%s1 + $0x228] sm:$0xff]
    %v96 = vld [vmem:[%s1 + $0x230] sm:$0xff]
    %v97 = vld [vmem:[%s1 + $0x238] sm:$0xff]
    %v98 = vld [vmem:[%s1 + $0x240] sm:$0xff]
    %v99 = vld [vmem:[%s1 + $0x248] sm:$0xff]
    %v100 = vld [vmem:[%s1 + $0x250] sm:$0xff]
    %v101 = vld [vmem:[%s1 + $0x258] sm:$0xff]
    %v102 = vld [vmem:[%s1 + $0x260] sm:$0xff]
    %v103 = vld [vmem:[%s1 + $0x268] sm:$0xff]
    %v104 = vld [vmem:[%s1 + $0x270] sm:$0xff]
    %v105 = vld [vmem:[%s1 + $0x278] sm:$0xff]
    %v106 = vld [vmem:[%s1 + $0x280] sm:$0xff]
    %v107 = vld [vmem:[%s1 + $0x288] sm:$0xff]
    %v108 = vld [vmem:[%s1 + $0x290] sm:$0xff]
    %v109 = vld [vmem:[%s1 + $0x298] sm:$0xff]
    %v110 = vld [vmem:[%s1 + $0x2a0] sm:$0xff]
    %v111 = vld [vmem:[%s1 + $0x2a8] sm:$0xff]
    %v112 = vld [vmem:[%s1 + $0x2b0] sm:$0xff]
    %v113 = vld [vmem:[%s1 + $0x2b8] sm:$0xff]
    %v114 = vld [vmem:[%s1 + $0x2c0] sm:$0xff]
    %v115 = vld [vmem:[%s1 + $0x2c8] sm:$0xff]
    %v116 = vld [vmem:[%s1 + $0x2d0] sm:$0xff]
    %v117 = vld [vmem:[%s1 + $0x2d8] sm:$0xff]
    %v118 = vld [vmem:[%s1 + $0x2e0] sm:$0xff]
    %v119 = vld [vmem:[%s1 + $0x2e8] sm:$0xff]
    %v120 = vld [vmem:[%s1 + $0x2f0] sm:$0xff]
    %v121 = vld [vmem:[%s1 + $0x2f8] sm:$0xff]
    %v122 = vld [vmem:[%s1 + $0x300] sm:$0xff]
    %v123 = vld [vmem:[%s1 + $0x308] sm:$0xff]
    %v124 = vld [vmem:[%s2] sm:$0x3]
    %v126 = vlaneseq
    %v127 = vshrl.u32 %v126, 7
    %v128 = vsub.s32 0, %v127
    %v129 = vrot.slane %v124, %v128
    %v130 = vlaneseq
    %v131 = vshrl.u32 %v130, 7
    %v132 = vsub.s32 1, %v131
    %v133 = vrot.slane %v124, %v132
    %v140 = vunpack.c.l.b16 %v22
    %v141 = vunpack.c.h.b16 %v22
    %v142 = vunpack.c.l.b16 %v23
    %v143 = vunpack.c.h.b16 %v23
    %v144 = vunpack.c.l.b16 %v24
    %v145 = vunpack.c.h.b16 %v24
    %v146 = vunpack.c.l.b16 %v25
    %v147 = vpack.c.b16 %v140, %v140
    %v148 = vpack.c.b16 %v141, %v141
    %v149 = vpack.c.b16 %v142, %v142
    %v150 = vpack.c.b16 %v143, %v143
    %v151 = vpack.c.b16 %v144, %v144
    %v152 = vpack.c.b16 %v145, %v145
    %v153 = vpack.c.b16 %v146, %v146
    %v258 = vunpack.c.l.b16 %v26
    %v259 = vunpack.c.h.b16 %v26
    %v260 = vunpack.c.l.b16 %v27
    %v261 = vunpack.c.h.b16 %v27
    %v262 = vunpack.c.l.b16 %v28
    %v263 = vunpack.c.h.b16 %v28
    %v264 = vunpack.c.l.b16 %v29
    %v265 = vunpack.c.h.b16 %v29
    %v266 = vunpack.c.l.b16 %v30
    %v267 = vunpack.c.h.b16 %v30
    %v268 = vunpack.c.l.b16 %v31
    %v269 = vunpack.c.h.b16 %v31
    %v270 = vunpack.c.l.b16 %v32
    %v271 = vunpack.c.h.b16 %v32
    %v272 = vunpack.c.l.b16 %v33
    %v273 = vunpack.c.h.b16 %v33
    %v274 = vunpack.c.l.b16 %v34
    %v275 = vunpack.c.h.b16 %v34
    %v276 = vunpack.c.l.b16 %v35
    %v277 = vunpack.c.h.b16 %v35
    %v278 = vunpack.c.l.b16 %v36
    %v279 = vunpack.c.h.b16 %v36
    %v280 = vunpack.c.l.b16 %v37
    %v281 = vunpack.c.h.b16 %v37
    %v282 = vunpack.c.l.b16 %v38
    %v283 = vunpack.c.h.b16 %v38
    %v284 = vunpack.c.l.b16 %v39
    %v285 = vunpack.c.h.b16 %v39
    %v286 = vunpack.c.l.b16 %v40
    %v287 = vunpack.c.h.b16 %v40
    %v288 = vunpack.c.l.b16 %v41
    %v289 = vunpack.c.h.b16 %v41
    %v290 = vunpack.c.l.b16 %v42
    %v291 = vunpack.c.h.b16 %v42
    %v292 = vunpack.c.l.b16 %v43
    %v293 = vunpack.c.h.b16 %v43
    %v294 = vunpack.c.l.b16 %v44
    %v295 = vunpack.c.h.b16 %v44
    %v296 = vunpack.c.l.b16 %v45
    %v297 = vunpack.c.h.b16 %v45
    %v298 = vunpack.c.l.b16 %v46
    %v299 = vunpack.c.h.b16 %v46
    %v300 = vunpack.c.l.b16 %v47
    %v301 = vunpack.c.h.b16 %v47
    %v302 = vunpack.c.l.b16 %v48
    %v303 = vunpack.c.h.b16 %v48
    %v304 = vunpack.c.l.b16 %v49
    %v305 = vunpack.c.h.b16 %v49
    %v306 = vunpack.c.l.b16 %v50
    %v307 = vunpack.c.h.b16 %v50
    %v308 = vunpack.c.l.b16 %v51
    %v309 = vunpack.c.h.b16 %v51
    %v310 = vunpack.c.l.b16 %v52
    %v311 = vunpack.c.h.b16 %v52
    %v312 = vunpack.c.l.b16 %v53
    %v313 = vunpack.c.h.b16 %v53
    %v314 = vunpack.c.l.b16 %v54
    %v315 = vunpack.c.h.b16 %v54
    %v316 = vunpack.c.l.b16 %v55
    %v317 = vunpack.c.h.b16 %v55
    %v318 = vunpack.c.l.b16 %v56
    %v319 = vunpack.c.h.b16 %v56
    %v320 = vunpack.c.l.b16 %v57
    %v321 = vunpack.c.h.b16 %v57
    %v322 = vunpack.c.l.b16 %v58
    %v323 = vunpack.c.h.b16 %v58
    %v324 = vunpack.c.l.b16 %v59
    %v325 = vunpack.c.h.b16 %v59
    %v326 = vunpack.c.l.b16 %v60
    %v327 = vunpack.c.h.b16 %v60
    %v328 = vunpack.c.l.b16 %v61
    %v329 = vunpack.c.h.b16 %v61
    %v330 = vunpack.c.l.b16 %v62
    %v331 = vunpack.c.h.b16 %v62
    %v332 = vunpack.c.l.b16 %v63
    %v333 = vunpack.c.h.b16 %v63
    %v334 = vunpack.c.l.b16 %v64
    %v335 = vunpack.c.h.b16 %v64
    %v336 = vunpack.c.l.b16 %v65
    %v337 = vunpack.c.h.b16 %v65
    %v338 = vunpack.c.l.b16 %v66
    %v339 = vunpack.c.h.b16 %v66
    %v340 = vunpack.c.l.b16 %v67
    %v341 = vunpack.c.h.b16 %v67
    %v342 = vunpack.c.l.b16 %v68
    %v343 = vunpack.c.h.b16 %v68
    %v344 = vunpack.c.l.b16 %v69
    %v345 = vunpack.c.h.b16 %v69
    %v346 = vunpack.c.l.b16 %v70
    %v347 = vunpack.c.h.b16 %v70
    %v348 = vunpack.c.l.b16 %v71
    %v349 = vunpack.c.h.b16 %v71
    %v350 = vunpack.c.l.b16 %v72
    %v351 = vunpack.c.h.b16 %v72
    %v352 = vunpack.c.l.b16 %v73
    %v353 = vunpack.c.h.b16 %v73
    %v354 = vunpack.c.l.b16 %v74
    %v355 = vunpack.c.h.b16 %v74
    %v356 = vunpack.c.l.b16 %v75
    %v357 = vunpack.c.h.b16 %v75
    %v358 = vunpack.c.l.b16 %v76
    %v359 = vunpack.c.h.b16 %v76
    %v360 = vunpack.c.l.b16 %v77
    %v361 = vunpack.c.h.b16 %v77
    %v362 = vunpack.c.l.b16 %v78
    %v363 = vunpack.c.h.b16 %v78
    %v364 = vunpack.c.l.b16 %v79
    %v365 = vunpack.c.h.b16 %v79
    %v366 = vunpack.c.l.b16 %v80
    %v367 = vunpack.c.h.b16 %v80
    %v368 = vunpack.c.l.b16 %v81
    %v369 = vunpack.c.h.b16 %v81
    %v370 = vunpack.c.l.b16 %v82
    %v371 = vunpack.c.h.b16 %v82
    %v372 = vunpack.c.l.b16 %v83
    %v373 = vunpack.c.h.b16 %v83
    %v374 = vunpack.c.l.b16 %v84
    %v375 = vunpack.c.h.b16 %v84
    %v376 = vunpack.c.l.b16 %v85
    %v377 = vunpack.c.h.b16 %v85
    %v378 = vunpack.c.l.b16 %v86
    %v379 = vunpack.c.h.b16 %v86
    %v380 = vunpack.c.l.b16 %v87
    %v381 = vunpack.c.h.b16 %v87
    %v382 = vunpack.c.l.b16 %v88
    %v383 = vunpack.c.h.b16 %v88
    %v384 = vunpack.c.l.b16 %v89
    %v385 = vunpack.c.h.b16 %v89
    %v386 = vunpack.c.l.b16 %v90
    %v387 = vunpack.c.h.b16 %v90
    %v388 = vunpack.c.l.b16 %v91
    %v389 = vunpack.c.h.b16 %v91
    %v390 = vunpack.c.l.b16 %v92
    %v391 = vunpack.c.h.b16 %v92
    %v392 = vunpack.c.l.b16 %v93
    %v393 = vunpack.c.h.b16 %v93
    %v394 = vunpack.c.l.b16 %v94
    %v395 = vunpack.c.h.b16 %v94
    %v396 = vunpack.c.l.b16 %v95
    %v397 = vunpack.c.h.b16 %v95
    %v398 = vunpack.c.l.b16 %v96
    %v399 = vunpack.c.h.b16 %v96
    %v400 = vunpack.c.l.b16 %v97
    %v401 = vunpack.c.h.b16 %v97
    %v402 = vunpack.c.l.b16 %v98
    %v403 = vunpack.c.h.b16 %v98
    %v404 = vunpack.c.l.b16 %v99
    %v405 = vunpack.c.h.b16 %v99
    %v406 = vunpack.c.l.b16 %v100
    %v407 = vunpack.c.h.b16 %v100
    %v408 = vunpack.c.l.b16 %v101
    %v409 = vunpack.c.h.b16 %v101
    %v410 = vunpack.c.l.b16 %v102
    %v411 = vunpack.c.h.b16 %v102
    %v412 = vunpack.c.l.b16 %v103
    %v413 = vunpack.c.h.b16 %v103
    %v414 = vunpack.c.l.b16 %v104
    %v415 = vunpack.c.h.b16 %v104
    %v416 = vunpack.c.l.b16 %v105
    %v417 = vunpack.c.h.b16 %v105
    %v418 = vunpack.c.l.b16 %v106
    %v419 = vunpack.c.h.b16 %v106
    %v420 = vunpack.c.l.b16 %v107
    %v421 = vunpack.c.h.b16 %v107
    %v422 = vunpack.c.l.b16 %v108
    %v423 = vunpack.c.h.b16 %v108
    %v424 = vunpack.c.l.b16 %v109
    %v425 = vunpack.c.h.b16 %v109
    %v426 = vunpack.c.l.b16 %v110
    %v427 = vunpack.c.h.b16 %v110
    %v428 = vunpack.c.l.b16 %v111
    %v429 = vunpack.c.h.b16 %v111
    %v430 = vunpack.c.l.b16 %v112
    %v431 = vunpack.c.h.b16 %v112
    %v432 = vunpack.c.l.b16 %v113
    %v433 = vunpack.c.h.b16 %v113
    %v434 = vunpack.c.l.b16 %v114
    %v435 = vunpack.c.h.b16 %v114
    %v436 = vunpack.c.l.b16 %v115
    %v437 = vunpack.c.h.b16 %v115
    %v438 = vunpack.c.l.b16 %v116
    %v439 = vunpack.c.h.b16 %v116
    %v440 = vunpack.c.l.b16 %v117
    %v441 = vunpack.c.h.b16 %v117
    %v442 = vunpack.c.l.b16 %v118
    %v443 = vunpack.c.h.b16 %v118
    %v444 = vunpack.c.l.b16 %v119
    %v445 = vunpack.c.h.b16 %v119
    %v446 = vunpack.c.l.b16 %v120
    %v447 = vunpack.c.h.b16 %v120
    %v448 = vunpack.c.l.b16 %v121
    %v449 = vunpack.c.h.b16 %v121
    %v450 = vunpack.c.l.b16 %v122
    %v451 = vunpack.c.h.b16 %v122
    %v452 = vunpack.c.l.b16 %v123
    %v453 = vunpack.c.h.b16 %v123
    %v454 = vpack.c.b16 %v260, %v258
    %v455 = vpack.c.b16 %v261, %v259
    %v456 = vpack.c.b16 %v264, %v262
    %v457 = vpack.c.b16 %v265, %v263
    %v458 = vpack.c.b16 %v268, %v266
    %v459 = vpack.c.b16 %v269, %v267
    %v460 = vpack.c.b16 %v272, %v270
    %v461 = vpack.c.b16 %v273, %v271
    %v462 = vpack.c.b16 %v276, %v274
    %v463 = vpack.c.b16 %v277, %v275
    %v464 = vpack.c.b16 %v280, %v278
    %v465 = vpack.c.b16 %v281, %v279
    %v466 = vpack.c.b16 %v284, %v282
    %v467 = vpack.c.b16 %v285, %v283
    %v468 = vpack.c.b16 %v288, %v286
    %v469 = vpack.c.b16 %v289, %v287
    %v470 = vpack.c.b16 %v292, %v290
    %v471 = vpack.c.b16 %v293, %v291
    %v472 = vpack.c.b16 %v296, %v294
    %v473 = vpack.c.b16 %v297, %v295
    %v474 = vpack.c.b16 %v300, %v298
    %v475 = vpack.c.b16 %v301, %v299
    %v476 = vpack.c.b16 %v304, %v302
    %v477 = vpack.c.b16 %v305, %v303
    %v478 = vpack.c.b16 %v308, %v306
    %v479 = vpack.c.b16 %v309, %v307
    %v480 = vpack.c.b16 %v312, %v310
    %v481 = vpack.c.b16 %v313, %v311
    %v482 = vpack.c.b16 %v316, %v314
    %v483 = vpack.c.b16 %v317, %v315
    %v484 = vpack.c.b16 %v320, %v318
    %v485 = vpack.c.b16 %v321, %v319
    %v486 = vpack.c.b16 %v324, %v322
    %v487 = vpack.c.b16 %v325, %v323
    %v488 = vpack.c.b16 %v328, %v326
    %v489 = vpack.c.b16 %v329, %v327
    %v490 = vpack.c.b16 %v332, %v330
    %v491 = vpack.c.b16 %v333, %v331
    %v492 = vpack.c.b16 %v336, %v334
    %v493 = vpack.c.b16 %v337, %v335
    %v494 = vpack.c.b16 %v340, %v338
    %v495 = vpack.c.b16 %v341, %v339
    %v496 = vpack.c.b16 %v344, %v342
    %v497 = vpack.c.b16 %v345, %v343
    %v498 = vpack.c.b16 %v348, %v346
    %v499 = vpack.c.b16 %v349, %v347
    %v500 = vpack.c.b16 %v352, %v350
    %v501 = vpack.c.b16 %v353, %v351
    %v502 = vpack.c.b16 %v356, %v354
    %v503 = vpack.c.b16 %v357, %v355
    %v504 = vpack.c.b16 %v360, %v358
    %v505 = vpack.c.b16 %v361, %v359
    %v506 = vpack.c.b16 %v364, %v362
    %v507 = vpack.c.b16 %v365, %v363
    %v508 = vpack.c.b16 %v368, %v366
    %v509 = vpack.c.b16 %v369, %v367
    %v510 = vpack.c.b16 %v372, %v370
    %v511 = vpack.c.b16 %v373, %v371
    %v512 = vpack.c.b16 %v376, %v374
    %v513 = vpack.c.b16 %v377, %v375
    %v514 = vpack.c.b16 %v380, %v378
    %v515 = vpack.c.b16 %v381, %v379
    %v516 = vpack.c.b16 %v384, %v382
    %v517 = vpack.c.b16 %v385, %v383
    %v518 = vpack.c.b16 %v388, %v386
    %v519 = vpack.c.b16 %v389, %v387
    %v520 = vpack.c.b16 %v392, %v390
    %v521 = vpack.c.b16 %v393, %v391
    %v522 = vpack.c.b16 %v396, %v394
    %v523 = vpack.c.b16 %v397, %v395
    %v524 = vpack.c.b16 %v400, %v398
    %v525 = vpack.c.b16 %v401, %v399
    %v526 = vpack.c.b16 %v404, %v402
    %v527 = vpack.c.b16 %v405, %v403
    %v528 = vpack.c.b16 %v408, %v406
    %v529 = vpack.c.b16 %v409, %v407
    %v530 = vpack.c.b16 %v412, %v410
    %v531 = vpack.c.b16 %v413, %v411
    %v532 = vpack.c.b16 %v416, %v414
    %v533 = vpack.c.b16 %v417, %v415
    %v534 = vpack.c.b16 %v420, %v418
    %v535 = vpack.c.b16 %v421, %v419
    %v536 = vpack.c.b16 %v424, %v422
    %v537 = vpack.c.b16 %v425, %v423
    %v538 = vpack.c.b16 %v428, %v426
    %v539 = vpack.c.b16 %v429, %v427
    %v540 = vpack.c.b16 %v432, %v430
    %v541 = vpack.c.b16 %v433, %v431
    %v542 = vpack.c.b16 %v436, %v434
    %v543 = vpack.c.b16 %v437, %v435
    %v544 = vpack.c.b16 %v440, %v438
    %v545 = vpack.c.b16 %v441, %v439
    %v546 = vpack.c.b16 %v444, %v442
    %v547 = vpack.c.b16 %v445, %v443
    %v548 = vpack.c.b16 %v448, %v446
    %v549 = vpack.c.b16 %v449, %v447
    %v550 = vpack.c.b16 %v452, %v450
    %v551 = vpack.c.b16 %v453, %v451
    %vm650 = vcmask 130048
    %v652 = vsel %vm650, %v153, 0
    %654 = vmatprep.subr.bf16.mxu0 %v455
    %655 = vmatpush1.bf16.msra.mxu0 %v454
    %656 = vmatprep.subr.bf16.mxu0 %v457
    %657 = vmatpush1.bf16.msra.mxu0 %v456
    %658 = vmatprep.subr.bf16.mxu0 %v459
    %659 = vmatpush1.bf16.msra.mxu0 %v458
    %660 = vmatprep.subr.bf16.mxu0 %v461
    %661 = vmatpush1.bf16.msra.mxu0 %v460
    %662 = vmatprep.subr.bf16.mxu0 %v463
    %663 = vmatpush1.bf16.msra.mxu0 %v462
    %664 = vmatprep.subr.bf16.mxu0 %v465
    %665 = vmatpush1.bf16.msra.mxu0 %v464
    %666 = vmatprep.subr.bf16.mxu0 %v467
    %667 = vmatpush1.bf16.msra.mxu0 %v466
    %668 = vmatprep.subr.bf16.mxu0 %v469
    %669 = vmatpush1.bf16.msra.mxu0 %v468
    %670 = vmatprep.subr.bf16.mxu0 %v471
    %671 = vmatpush1.bf16.msra.mxu0 %v470
    %672 = vmatprep.subr.bf16.mxu0 %v473
    %673 = vmatpush1.bf16.msra.mxu0 %v472
    %674 = vmatprep.subr.bf16.mxu0 %v475
    %675 = vmatpush1.bf16.msra.mxu0 %v474
    %676 = vmatprep.subr.bf16.mxu0 %v477
    %677 = vmatpush1.bf16.msra.mxu0 %v476
    %678 = vmatprep.subr.bf16.mxu0 %v479
    %679 = vmatpush1.bf16.msra.mxu0 %v478
    %680 = vmatprep.subr.bf16.mxu0 %v481
    %681 = vmatpush1.bf16.msra.mxu0 %v480
    %682 = vmatprep.subr.bf16.mxu0 %v483
    %683 = vmatpush1.bf16.msra.mxu0 %v482
    %684 = vmatprep.subr.bf16.mxu0 %v485
    %685 = vmatpush1.bf16.msra.mxu0 %v484
    %686 = vmatprep.mubr.bf16.mxu0 %v148
    %687 = vmatmul.mubr.bf16.gmra.mrb[0].mxu0 %v147
    %v688 = vpop.f32.mrb[0].mxu0
    %v689 = vadd.f32 %v129, %v688
    %v690 = vpop.f32.mrb[0].mxu0
    %v691 = vadd.f32 %v133, %v690
    %v692 = vpop.f32.mrb[0].mxu0
    %v693 = vpop.f32.mrb[0].mxu0
    %694 = vdwg.mxu0
    %695 = vmatprep.subr.bf16.mxu0 %v487
    %696 = vmatpush1.bf16.msra.mxu0 %v486
    %697 = vmatprep.subr.bf16.mxu0 %v489
    %698 = vmatpush1.bf16.msra.mxu0 %v488
    %699 = vmatprep.subr.bf16.mxu0 %v491
    %700 = vmatpush1.bf16.msra.mxu0 %v490
    %701 = vmatprep.subr.bf16.mxu0 %v493
    %702 = vmatpush1.bf16.msra.mxu0 %v492
    %703 = vmatprep.subr.bf16.mxu0 %v495
    %704 = vmatpush1.bf16.msra.mxu0 %v494
    %705 = vmatprep.subr.bf16.mxu0 %v497
    %706 = vmatpush1.bf16.msra.mxu0 %v496
    %707 = vmatprep.subr.bf16.mxu0 %v499
    %708 = vmatpush1.bf16.msra.mxu0 %v498
    %709 = vmatprep.subr.bf16.mxu0 %v501
    %710 = vmatpush1.bf16.msra.mxu0 %v500
    %711 = vmatprep.subr.bf16.mxu0 %v503
    %712 = vmatpush1.bf16.msra.mxu0 %v502
    %713 = vmatprep.subr.bf16.mxu0 %v505
    %714 = vmatpush1.bf16.msra.mxu0 %v504
    %715 = vmatprep.subr.bf16.mxu0 %v507
    %716 = vmatpush1.bf16.msra.mxu0 %v506
    %717 = vmatprep.subr.bf16.mxu0 %v509
    %718 = vmatpush1.bf16.msra.mxu0 %v508
    %719 = vmatprep.subr.bf16.mxu0 %v511
    %720 = vmatpush1.bf16.msra.mxu0 %v510
    %721 = vmatprep.subr.bf16.mxu0 %v513
    %722 = vmatpush1.bf16.msra.mxu0 %v512
    %723 = vmatprep.subr.bf16.mxu0 %v515
    %724 = vmatpush1.bf16.msra.mxu0 %v514
    %725 = vmatprep.subr.bf16.mxu0 %v517
    %726 = vmatpush1.bf16.msra.mxu0 %v516
    %727 = vmatprep.mubr.bf16.mxu0 %v150
    %728 = vmatmul.mubr.bf16.gmra.mrb[0].mxu0 %v149
    %v729 = vpop.f32.mrb[0].mxu0
    %v730 = vadd.f32 %v689, %v729
    %v731 = vpop.f32.mrb[0].mxu0
    %v732 = vadd.f32 %v691, %v731
    %v733 = vpop.f32.mrb[0].mxu0
    %v734 = vpop.f32.mrb[0].mxu0
    %735 = vdwg.mxu0
    %736 = vmatprep.subr.bf16.mxu0 %v519
    %737 = vmatpush1.bf16.msra.mxu0 %v518
    %738 = vmatprep.subr.bf16.mxu0 %v521
    %739 = vmatpush1.bf16.msra.mxu0 %v520
    %740 = vmatprep.subr.bf16.mxu0 %v523
    %741 = vmatpush1.bf16.msra.mxu0 %v522
    %742 = vmatprep.subr.bf16.mxu0 %v525
    %743 = vmatpush1.bf16.msra.mxu0 %v524
    %744 = vmatprep.subr.bf16.mxu0 %v527
    %745 = vmatpush1.bf16.msra.mxu0 %v526
    %746 = vmatprep.subr.bf16.mxu0 %v529
    %747 = vmatpush1.bf16.msra.mxu0 %v528
    %748 = vmatprep.subr.bf16.mxu0 %v531
    %749 = vmatpush1.bf16.msra.mxu0 %v530
    %750 = vmatprep.subr.bf16.mxu0 %v533
    %751 = vmatpush1.bf16.msra.mxu0 %v532
    %752 = vmatprep.subr.bf16.mxu0 %v535
    %753 = vmatpush1.bf16.msra.mxu0 %v534
    %754 = vmatprep.subr.bf16.mxu0 %v537
    %755 = vmatpush1.bf16.msra.mxu0 %v536
    %756 = vmatprep.subr.bf16.mxu0 %v539
    %757 = vmatpush1.bf16.msra.mxu0 %v538
    %758 = vmatprep.subr.bf16.mxu0 %v541
    %759 = vmatpush1.bf16.msra.mxu0 %v540
    %760 = vmatprep.subr.bf16.mxu0 %v543
    %761 = vmatpush1.bf16.msra.mxu0 %v542
    %762 = vmatprep.subr.bf16.mxu0 %v545
    %763 = vmatpush1.bf16.msra.mxu0 %v544
    %764 = vmatprep.subr.bf16.mxu0 %v547
    %765 = vmatpush1.bf16.msra.mxu0 %v546
    %766 = vmatprep.subr.bf16.mxu0 %v549
    %767 = vmatpush1.bf16.msra.mxu0 %v548
    %768 = vmatprep.mubr.bf16.mxu0 %v152
    %769 = vmatmul.mubr.bf16.gmra.mrb[0].mxu0 %v151
    %v770 = vpop.f32.mrb[0].mxu0
    %v771 = vadd.f32 %v730, %v770
    %v772 = vpop.f32.mrb[0].mxu0
    %v773 = vadd.f32 %v732, %v772
    %v774 = vpop.f32.mrb[0].mxu0
    %v775 = vpop.f32.mrb[0].mxu0
    %776 = vdwg.mxu0
    %777 = vmatprep.subr.bf16.mxu0 %v551
    %778 = vmatpush1.bf16.msra.mxu0 %v550
    %779 = vmatprep.subr.bf16.mxu0 0
    %780 = vmatpush1.bf16.msra.mxu0 0
    %781 = vmatprep.subr.bf16.mxu0 0
    %782 = vmatpush1.bf16.msra.mxu0 0
    %783 = vmatprep.subr.bf16.mxu0 0
    %784 = vmatpush1.bf16.msra.mxu0 0
    %785 = vmatprep.subr.bf16.mxu0 0
    %786 = vmatpush1.bf16.msra.mxu0 0
    %787 = vmatprep.subr.bf16.mxu0 0
    %788 = vmatpush1.bf16.msra.mxu0 0
    %789 = vmatprep.subr.bf16.mxu0 0
    %790 = vmatpush1.bf16.msra.mxu0 0
    %791 = vmatprep.subr.bf16.mxu0 0
    %792 = vmatpush1.bf16.msra.mxu0 0
    %793 = vmatprep.subr.bf16.mxu0 0
    %794 = vmatpush1.bf16.msra.mxu0 0
    %795 = vmatprep.subr.bf16.mxu0 0
    %796 = vmatpush1.bf16.msra.mxu0 0
    %797 = vmatprep.subr.bf16.mxu0 0
    %798 = vmatpush1.bf16.msra.mxu0 0
    %799 = vmatprep.subr.bf16.mxu0 0
    %800 = vmatpush1.bf16.msra.mxu0 0
    %801 = vmatprep.subr.bf16.mxu0 0
    %802 = vmatpush1.bf16.msra.mxu0 0
    %803 = vmatprep.subr.bf16.mxu0 0
    %804 = vmatpush1.bf16.msra.mxu0 0
    %805 = vmatprep.subr.bf16.mxu0 0
    %806 = vmatpush1.bf16.msra.mxu0 0
    %807 = vmatprep.subr.bf16.mxu0 0
    %808 = vmatpush1.bf16.msra.mxu0 0
    %809 = vmatprep.mubr.bf16.mxu0 0
    %810 = vmatmul.mubr.bf16.gmra.mrb[0].mxu0 %v652
    %v811 = vpop.f32.mrb[0].mxu0
    %v812 = vadd.f32 %v771, %v811
    %v813 = vpop.f32.mrb[0].mxu0
    %v814 = vadd.f32 %v773, %v813
    %v815 = vpop.f32.mrb[0].mxu0
    %v816 = vpop.f32.mrb[0].mxu0
    %817 = vdwg.mxu0
    %v818 = vmax.f32 %v812, 0.0
    %v819 = vmax.f32 %v814, 0.0
    %v820 = vpack.c.bf16 %v818, %v818
    %v821 = vpack.c.bf16 %v819, %v819
    %v822 = vld [vmem:[%s3] sm:$0xf]
    %v823 = vld [vmem:[%s3 + $0x4] sm:$0xf]
    %v824 = vld [vmem:[%s3 + $0x8] sm:$0xf]
    %v825 = vld [vmem:[%s3 + $0xc] sm:$0xf]
    %v826 = vld [vmem:[%s3 + $0x10] sm:$0xf]
    %v827 = vld [vmem:[%s3 + $0x14] sm:$0xf]
    %v828 = vld [vmem:[%s3 + $0x18] sm:$0xf]
    %v829 = vld [vmem:[%s3 + $0x1c] sm:$0xf]
    %v830 = vld [vmem:[%s3 + $0x20] sm:$0xf]
    %v831 = vld [vmem:[%s3 + $0x24] sm:$0xf]
    %v832 = vld [vmem:[%s3 + $0x28] sm:$0xf]
    %v833 = vld [vmem:[%s3 + $0x2c] sm:$0xf]
    %v834 = vld [vmem:[%s3 + $0x30] sm:$0xf]
    %v835 = vld [vmem:[%s3 + $0x34] sm:$0xf]
    %v836 = vld [vmem:[%s3 + $0x38] sm:$0xf]
    %v837 = vld [vmem:[%s3 + $0x3c] sm:$0xf]
    %v838 = vld [vmem:[%s3 + $0x40] sm:$0xf]
    %v839 = vld [vmem:[%s3 + $0x44] sm:$0xf]
    %v840 = vld [vmem:[%s3 + $0x48] sm:$0xf]
    %v841 = vld [vmem:[%s3 + $0x4c] sm:$0xf]
    %v842 = vld [vmem:[%s3 + $0x50] sm:$0xf]
    %v843 = vld [vmem:[%s3 + $0x54] sm:$0xf]
    %v844 = vld [vmem:[%s3 + $0x58] sm:$0xf]
    %v845 = vld [vmem:[%s3 + $0x5c] sm:$0xf]
    %v846 = vld [vmem:[%s3 + $0x60] sm:$0x3]
    %v847 = vld [vmem:[%s4] sm:$0x1]
    %v849 = vlaneseq
    %v850 = vshrl.u32 %v849, 7
    %v851 = vsub.s32 0, %v850
    %v852 = vrot.slane %v847, %v851
    %v879 = vunpack.c.l.b16 %v822
    %v880 = vunpack.c.l.b16 %v823
    %v881 = vunpack.c.l.b16 %v824
    %v882 = vunpack.c.l.b16 %v825
    %v883 = vunpack.c.l.b16 %v826
    %v884 = vunpack.c.l.b16 %v827
    %v885 = vunpack.c.l.b16 %v828
    %v886 = vunpack.c.l.b16 %v829
    %v887 = vunpack.c.l.b16 %v830
    %v888 = vunpack.c.l.b16 %v831
    %v889 = vunpack.c.l.b16 %v832
    %v890 = vunpack.c.l.b16 %v833
    %v891 = vunpack.c.l.b16 %v834
    %v892 = vunpack.c.l.b16 %v835
    %v893 = vunpack.c.l.b16 %v836
    %v894 = vunpack.c.l.b16 %v837
    %v895 = vunpack.c.l.b16 %v838
    %v896 = vunpack.c.l.b16 %v839
    %v897 = vunpack.c.l.b16 %v840
    %v898 = vunpack.c.l.b16 %v841
    %v899 = vunpack.c.l.b16 %v842
    %v900 = vunpack.c.l.b16 %v843
    %v901 = vunpack.c.l.b16 %v844
    %v902 = vunpack.c.l.b16 %v845
    %v903 = vunpack.c.l.b16 %v846
    %v904 = vpack.c.b16 %v880, %v879
    %v905 = vpack.c.b16 %v882, %v881
    %v906 = vpack.c.b16 %v884, %v883
    %v907 = vpack.c.b16 %v886, %v885
    %v908 = vpack.c.b16 %v888, %v887
    %v909 = vpack.c.b16 %v890, %v889
    %v910 = vpack.c.b16 %v892, %v891
    %v911 = vpack.c.b16 %v894, %v893
    %v912 = vpack.c.b16 %v896, %v895
    %v913 = vpack.c.b16 %v898, %v897
    %v914 = vpack.c.b16 %v900, %v899
    %v915 = vpack.c.b16 %v902, %v901
    %v916 = vpack.c.b16 %v903, %v903
    %vm929 = vcmask 556032
    %v931 = vsel %vm929, %v821, 0
    %vm933 = vcmask 1041408
    %v935 = vsel %vm933, %v916, 0
    %937 = vmatprep.subr.bf16.mxu0 0
    %938 = vmatpush1.bf16.msra.mxu0 %v904
    %939 = vmatprep.subr.bf16.mxu0 0
    %940 = vmatpush1.bf16.msra.mxu0 %v905
    %941 = vmatprep.subr.bf16.mxu0 0
    %942 = vmatpush1.bf16.msra.mxu0 %v906
    %943 = vmatprep.subr.bf16.mxu0 0
    %944 = vmatpush1.bf16.msra.mxu0 %v907
    %945 = vmatprep.subr.bf16.mxu0 0
    %946 = vmatpush1.bf16.msra.mxu0 %v908
    %947 = vmatprep.subr.bf16.mxu0 0
    %948 = vmatpush1.bf16.msra.mxu0 %v909
    %949 = vmatprep.subr.bf16.mxu0 0
    %950 = vmatpush1.bf16.msra.mxu0 %v910
    %951 = vmatprep.subr.bf16.mxu0 0
    %952 = vmatpush1.bf16.msra.mxu0 %v911
    %953 = vmatprep.subr.bf16.mxu0 0
    %954 = vmatpush1.bf16.msra.mxu0 %v912
    %955 = vmatprep.subr.bf16.mxu0 0
    %956 = vmatpush1.bf16.msra.mxu0 %v913
    %957 = vmatprep.subr.bf16.mxu0 0
    %958 = vmatpush1.bf16.msra.mxu0 %v914
    %959 = vmatprep.subr.bf16.mxu0 0
    %960 = vmatpush1.bf16.msra.mxu0 %v915
    %961 = vmatprep.subr.bf16.mxu0 0
    %962 = vmatpush1.bf16.msra.mxu0 %v935
    %963 = vmatprep.subr.bf16.mxu0 0
    %964 = vmatpush1.bf16.msra.mxu0 0
    %965 = vmatprep.subr.bf16.mxu0 0
    %966 = vmatpush1.bf16.msra.mxu0 0
    %967 = vmatprep.subr.bf16.mxu0 0
    %968 = vmatpush1.bf16.msra.mxu0 0
    %969 = vmatprep.mubr.bf16.mxu0 %v931
    %970 = vmatmul.mubr.bf16.gmra.mrb[0].mxu0 %v820
    %v971 = vpop.f32.mrb[0].mxu0
    %v972 = vadd.f32 %v852, %v971
    %v973 = vpop.f32.mrb[0].mxu0
    %v974 = vpop.f32.mrb[0].mxu0
    %v975 = vpop.f32.mrb[0].mxu0
    %976 = vdwg.mxu0
    %977 = vst [vmem:[#allocation2] sm:$0xff] %v972
    // Predicated region
    $region22: #{tpu_custom_call.1} parent=1 // pred_check
      _
    $region23: #{tpu_custom_call.1} parent=1 // pred_check_branch
      %979 = sbr.rel (0) target = $region25
    $region24: #{tpu_custom_call.1} parent=1 // pred_region
      %s981 = ssub.s32 128, 128
      %982 = vsyncadd [#allocation3], %s981
      %s984 = sshll.u32 [#allocation2], 4
      %s985 = int_to_ptr.vmem [resolvable:$true] %s984
      %987 = dma.vmem_to_hbm [thread:$0]  %s985, 128, %s5, [#allocation3]
    $region25: #{tpu_custom_call.1} parent=1 // pred_fallthru
      _
    // Predicated region
    $region26: #{tpu_custom_call.1} parent=1 // pred_check
      _
    $region27: #{tpu_custom_call.1} parent=1 // pred_check_branch
      %989 = sbr.rel (0) target = $region29
    $region28: #{tpu_custom_call.1} parent=1 // pred_region
      %990 = dma.done [#allocation3], 128
    $region29: #{tpu_custom_call.1} parent=1 // pred_fallthru
      _
    %991 = vsyncpa [#allocation3], 1

</llo_original>
